<compile_context>
chip_gen: v7x
topology: tpu7x:2x2x1
jax: 0.10.0
libtpu: 0.0.40
codegen_flags: <defaults>
</compile_context>

<pallas_src>
import functools

import jax
import jax.numpy as jnp
from jax.experimental import pallas as pl
from jax.experimental.pallas import tpu as pltpu


def _round_up(n: int, m: int) -> int:
    return ((n + m - 1) // m) * m


# ----------------------------------------------------------------------------
# Kernel
# ----------------------------------------------------------------------------
def _make_mlp_kernel(n_layers: int):
    """Fused (Linear -> ReLU [-> Dropout==identity]) x (n-1) -> Linear."""

    def kernel(*refs):
        x_ref, o_ref = refs[0], refs[-1]
        h = x_ref[...]                                   # bf16 (TB, S_pad)
        for li in range(n_layers):
            w_ref = refs[1 + 2 * li]                     # bf16 (in, out), VMEM-resident
            b_ref = refs[2 + 2 * li]                     # f32  (1, out)
            # MXU matmul with f32 accumulation; bias-add on the f32 accumulator.
            acc = jnp.dot(h, w_ref[...],
                          preferred_element_type=jnp.float32) + b_ref[...]
            if li < n_layers - 1:
                h = jnp.maximum(acc, 0.0).astype(jnp.bfloat16)   # ReLU (+Dropout id.)
            else:
                o_ref[...] = acc                         # lane-dense 128-padded f32

    return kernel


def _batch_index_map(i):
    return (i, 0)


def _resident_index_map(i):
    return (0, 0)


def _tile_plan():
    """(max_batch_tile, min_grid_steps) chosen from the TPU generation."""
    try:
        kind = jax.devices()[0].device_kind.lower()
    except Exception:
        return 128, 1
    if "v7" in kind or "tpu7" in kind:
        return 256, 2          # 2x256 MXU, 2 TensorCores/chip -> want >=2 grid steps
    if "v6" in kind:
        return 256, 1          # 2x256 MXU, 1 TensorCore
    return 128, 1              # v5e (4x128 MXU) and older / unknown


# ----------------------------------------------------------------------------
# One-time parameter preparation (do NOT call per forward pass)
# ----------------------------------------------------------------------------
def prepare_params(params):
    """Pad & cast parameters once; reuse the result for every forward call.

    params : list of (W, b); W is (in, out) (transpose of nn.Linear.weight),
             b is (1, out) or (out,), both float32.
    Returns (weights, biases):
        weights : tuple of bf16 matrices; W1 rows zero-padded so K is a
                  multiple of 128; last W columns zero-padded to a multiple of 128.
        biases  : tuple of f32 (1, out) rows; last bias padded like the last W.
    """
    n = len(params)
    weights, biases = [], []
    for li, (w, b) in enumerate(params):
        w = jnp.asarray(w, jnp.float32)
        b = jnp.asarray(b, jnp.float32).reshape(1, -1)
        if li == 0:
            k = w.shape[0]
            w = jnp.pad(w, ((0, _round_up(k, 128) - k), (0, 0)))
        if li == n - 1:
            a = w.shape[1]
            a_pad = _round_up(a, 128)
            w = jnp.pad(w, ((0, 0), (0, a_pad - a)))
            b = jnp.pad(b, ((0, 0), (0, a_pad - a)))
        weights.append(w.astype(jnp.bfloat16))
        biases.append(b)
    return tuple(weights), tuple(biases)


# ----------------------------------------------------------------------------
# Forward pass
# ----------------------------------------------------------------------------
@functools.partial(jax.jit, static_argnames=("action_size",))
def dqn_forward(x, weights, biases, *, action_size):
    """Forward pass of DQNNetwork (eval mode).

    x               : (B, state_size) float32
    weights, biases : output of prepare_params()
    Returns (B, action_size) float32 Q-values.
    """
    B, S = x.shape
    if B == 0:
        return jnp.zeros((0, action_size), jnp.float32)

    n_layers = len(weights)
    S_pad = weights[0].shape[0]          # K of the first matmul (128-aligned)
    A_pad = weights[-1].shape[1]         # lane-dense padded output width

    # Generation-aware batch tile (bf16 sublane granule = 16).
    max_tile, min_steps = _tile_plan()
    B16 = _round_up(B, 16)
    TB = min(B16, max_tile)
    if min_steps > 1 and TB > 128 and pl.cdiv(B16, TB) < min_steps:
        TB = 128                         # keep both v7x TensorCores busy
    B_pad = _round_up(B, TB)

    # Per-call activation prep only: cast to bf16, pad batch rows & K lanes.
    x_p = jnp.pad(x.astype(jnp.bfloat16), ((0, B_pad - B), (0, S_pad - S)))

    flat = [x_p]
    in_specs = [pl.BlockSpec((TB, S_pad), _batch_index_map)]
    for w, b in zip(weights, biases):
        flat.append(w)
        flat.append(b)
        # Constant index_map -> weights/biases stay VMEM-resident across tiles.
        in_specs.append(pl.BlockSpec(w.shape, _resident_index_map))
        in_specs.append(pl.BlockSpec(b.shape, _resident_index_map))

    out = pl.pallas_call(
        _make_mlp_kernel(n_layers),
        out_shape=jax.ShapeDtypeStruct((B_pad, A_pad), jnp.float32),
        grid=(B_pad // TB,),
        in_specs=in_specs,
        out_specs=pl.BlockSpec((TB, A_pad), _batch_index_map),
        compiler_params=pltpu.CompilerParams(
            dimension_semantics=("parallel",),
        ),
    )(*flat)

    return out[:B, :action_size]


# ----------------------------------------------------------------------------
# Init + references
# ----------------------------------------------------------------------------
def _xavier_uniform(key, fan_in, fan_out):
    # torch.nn.init.xavier_uniform_ (gain=1): U(-a, a), a = sqrt(6/(fan_in+fan_out))
    limit = (6.0 / (fan_in + fan_out)) ** 0.5
    return jax.random.uniform(key, (fan_in, fan_out), jnp.float32, -limit, limit)


def init_dqn_params(key, state_size, action_size, hidden_sizes=(512, 256, 128)):
    sizes = [state_size] + list(hidden_sizes) + [action_size]
    params = []
    for i in range(len(sizes) - 1):
        key, sub = jax.random.split(key)
        w = _xavier_uniform(sub, sizes[i], sizes[i + 1])
        b = jnp.full((1, sizes[i + 1]), 0.01, dtype=jnp.float32)  # bias.data.fill_(0.01)
        params.append((w, b))
    return params


def reference_forward(x, params):
    """Plain-JAX f32 reference (matches the PyTorch module in eval mode)."""
    h = x
    for i, (w, b) in enumerate(params):
        h = h @ w + b
        if i < len(params) - 1:
            h = jnp.maximum(h, 0.0)
    return h


def reference_forward_bf16(x, params):
    """Reference emulating the kernel's bf16-operand / f32-accumulate numerics."""
    h = x.astype(jnp.bfloat16)
    out = None
    for i, (w, b) in enumerate(params):
        acc = jnp.dot(h, w.astype(jnp.bfloat16),
                      preferred_element_type=jnp.float32) + b
        if i < len(params) - 1:
            h = jnp.maximum(acc, 0.0).astype(jnp.bfloat16)
        else:
            out = acc
    return out


if __name__ == "__main__":
    # Small, module-consistent shapes: 32-dim states, 8 actions,
    # default hidden sizes [512, 256, 128] from the PyTorch module.
    state_size = 32
    action_size = 8
    hidden_sizes = (512, 256, 128)

    key = jax.random.PRNGKey(0)
    pkey, xkey, xkey2 = jax.random.split(key, 3)

    params = init_dqn_params(pkey, state_size, action_size, hidden_sizes)
    weights, biases = prepare_params(params)   # one-time pad/cast, reused every call

    # Tiny act()-style batch.
    x_small = jax.random.normal(xkey, (2, state_size), dtype=jnp.float32)
    out_small = jax.block_until_ready(
        dqn_forward(x_small, weights, biases, action_size=action_size))
    assert out_small.shape == (2, action_size), out_small.shape
    assert jnp.allclose(out_small, reference_forward_bf16(x_small, params),
                        atol=5e-3, rtol=5e-3), "small batch: mismatch vs bf16 reference"
    assert jnp.allclose(out_small, reference_forward(x_small, params),
                        atol=5e-2, rtol=5e-2), "small batch: mismatch vs f32 reference"

    # Replay-buffer-style batch: exercises the multi-tile, generation-aware path.
    x_big = jax.random.normal(xkey2, (300, state_size), dtype=jnp.float32)
    out_big = jax.block_until_ready(
        dqn_forward(x_big, weights, biases, action_size=action_size))
    assert out_big.shape == (300, action_size), out_big.shape
    assert jnp.allclose(out_big, reference_forward_bf16(x_big, params),
                        atol=5e-3, rtol=5e-3), "large batch: mismatch vs bf16 reference"
    assert jnp.allclose(out_big, reference_forward(x_big, params),
                        atol=5e-2, rtol=5e-2), "large batch: mismatch vs f32 reference"

    print("KERNEL_OK")
</pallas_src>

<mosaic_0001>
module attributes {stable_mosaic.version = 11 : i64} {
  func.func @kernel(%arg0: i32, %arg1: memref<16x128xbf16, #tpu.memory_space<vmem>>, %arg2: memref<128x512xbf16, #tpu.memory_space<vmem>>, %arg3: memref<1x512xf32, #tpu.memory_space<vmem>>, %arg4: memref<512x256xbf16, #tpu.memory_space<vmem>>, %arg5: memref<1x256xf32, #tpu.memory_space<vmem>>, %arg6: memref<256x128xbf16, #tpu.memory_space<vmem>>, %arg7: memref<1x128xf32, #tpu.memory_space<vmem>>, %arg8: memref<128x128xbf16, #tpu.memory_space<vmem>>, %arg9: memref<1x128xf32, #tpu.memory_space<vmem>>, %arg10: memref<16x128xf32, #tpu.memory_space<vmem>>) attributes {dimension_semantics = [#tpu.dimension_semantics<parallel>], iteration_bounds = array<i64: 1>, scalar_prefetch = 0 : i64, scratch_operands = 0 : i64, tpu.core_type = #tpu.core_type<tc>, window_params = [{transform_indices = @transform_0, window_bounds = array<i64: 16, 128>}, {pipeline_mode = #tpu.pipeline_mode<synchronous>, transform_indices = @transform_1, window_bounds = array<i64: 128, 512>}, {pipeline_mode = #tpu.pipeline_mode<synchronous>, transform_indices = @transform_2, window_bounds = array<i64: 1, 512>}, {pipeline_mode = #tpu.pipeline_mode<synchronous>, transform_indices = @transform_3, window_bounds = array<i64: 512, 256>}, {pipeline_mode = #tpu.pipeline_mode<synchronous>, transform_indices = @transform_4, window_bounds = array<i64: 1, 256>}, {pipeline_mode = #tpu.pipeline_mode<synchronous>, transform_indices = @transform_5, window_bounds = array<i64: 256, 128>}, {pipeline_mode = #tpu.pipeline_mode<synchronous>, transform_indices = @transform_6, window_bounds = array<i64: 1, 128>}, {pipeline_mode = #tpu.pipeline_mode<synchronous>, transform_indices = @transform_7, window_bounds = array<i64: 128, 128>}, {pipeline_mode = #tpu.pipeline_mode<synchronous>, transform_indices = @transform_8, window_bounds = array<i64: 1, 128>}, {transform_indices = @transform_9, window_bounds = array<i64: 16, 128>}]} {
    %c0 = arith.constant 0 : index
    %c0_0 = arith.constant 0 : index
    %0 = vector.load %arg1[%c0, %c0_0] : memref<16x128xbf16, #tpu.memory_space<vmem>>, vector<16x128xbf16>
    %c0_1 = arith.constant 0 : index
    %c0_2 = arith.constant 0 : index
    %1 = vector.load %arg2[%c0_1, %c0_2] : memref<128x512xbf16, #tpu.memory_space<vmem>>, vector<128x512xbf16>
    %cst = arith.constant dense<0.000000e+00> : vector<16x512xf32>
    %2 = tpu.matmul %0, %1, %cst {dimension_numbers = #tpu.dot_dimension_numbers<[1], [0], [0], [1], [0, 0, 1, 1], [], []>} : vector<16x128xbf16>, vector<128x512xbf16>, vector<16x512xf32> -> vector<16x512xf32>
    %c0_3 = arith.constant 0 : index
    %c0_4 = arith.constant 0 : index
    %3 = vector.load %arg3[%c0_3, %c0_4] : memref<1x512xf32, #tpu.memory_space<vmem>>, vector<1x512xf32>
    %4 = vector.broadcast %3 : vector<1x512xf32> to vector<16x512xf32>
    %5 = arith.addf %2, %4 : vector<16x512xf32>
    %cst_5 = arith.constant 0.000000e+00 : f32
    %6 = vector.broadcast %cst_5 : f32 to vector<16x512xf32>
    %7 = arith.maximumf %5, %6 : vector<16x512xf32>
    %8 = arith.truncf %7 : vector<16x512xf32> to vector<16x512xbf16>
    %c0_6 = arith.constant 0 : index
    %c0_7 = arith.constant 0 : index
    %9 = vector.load %arg4[%c0_6, %c0_7] : memref<512x256xbf16, #tpu.memory_space<vmem>>, vector<512x256xbf16>
    %cst_8 = arith.constant dense<0.000000e+00> : vector<16x256xf32>
    %10 = tpu.matmul %8, %9, %cst_8 {dimension_numbers = #tpu.dot_dimension_numbers<[1], [0], [0], [1], [0, 0, 1, 1], [], []>} : vector<16x512xbf16>, vector<512x256xbf16>, vector<16x256xf32> -> vector<16x256xf32>
    %c0_9 = arith.constant 0 : index
    %c0_10 = arith.constant 0 : index
    %11 = vector.load %arg5[%c0_9, %c0_10] : memref<1x256xf32, #tpu.memory_space<vmem>>, vector<1x256xf32>
    %12 = vector.broadcast %11 : vector<1x256xf32> to vector<16x256xf32>
    %13 = arith.addf %10, %12 : vector<16x256xf32>
    %cst_11 = arith.constant 0.000000e+00 : f32
    %14 = vector.broadcast %cst_11 : f32 to vector<16x256xf32>
    %15 = arith.maximumf %13, %14 : vector<16x256xf32>
    %16 = arith.truncf %15 : vector<16x256xf32> to vector<16x256xbf16>
    %c0_12 = arith.constant 0 : index
    %c0_13 = arith.constant 0 : index
    %17 = vector.load %arg6[%c0_12, %c0_13] : memref<256x128xbf16, #tpu.memory_space<vmem>>, vector<256x128xbf16>
    %cst_14 = arith.constant dense<0.000000e+00> : vector<16x128xf32>
    %18 = tpu.matmul %16, %17, %cst_14 {dimension_numbers = #tpu.dot_dimension_numbers<[1], [0], [0], [1], [0, 0, 1, 1], [], []>} : vector<16x256xbf16>, vector<256x128xbf16>, vector<16x128xf32> -> vector<16x128xf32>
    %c0_15 = arith.constant 0 : index
    %c0_16 = arith.constant 0 : index
    %19 = vector.load %arg7[%c0_15, %c0_16] : memref<1x128xf32, #tpu.memory_space<vmem>>, vector<1x128xf32>
    %20 = vector.broadcast %19 : vector<1x128xf32> to vector<16x128xf32>
    %21 = arith.addf %18, %20 : vector<16x128xf32>
    %cst_17 = arith.constant 0.000000e+00 : f32
    %22 = vector.broadcast %cst_17 : f32 to vector<16x128xf32>
    %23 = arith.maximumf %21, %22 : vector<16x128xf32>
    %24 = arith.truncf %23 : vector<16x128xf32> to vector<16x128xbf16>
    %c0_18 = arith.constant 0 : index
    %c0_19 = arith.constant 0 : index
    %25 = vector.load %arg8[%c0_18, %c0_19] : memref<128x128xbf16, #tpu.memory_space<vmem>>, vector<128x128xbf16>
    %cst_20 = arith.constant dense<0.000000e+00> : vector<16x128xf32>
    %26 = tpu.matmul %24, %25, %cst_20 {dimension_numbers = #tpu.dot_dimension_numbers<[1], [0], [0], [1], [0, 0, 1, 1], [], []>} : vector<16x128xbf16>, vector<128x128xbf16>, vector<16x128xf32> -> vector<16x128xf32>
    %c0_21 = arith.constant 0 : index
    %c0_22 = arith.constant 0 : index
    %27 = vector.load %arg9[%c0_21, %c0_22] : memref<1x128xf32, #tpu.memory_space<vmem>>, vector<1x128xf32>
    %28 = vector.broadcast %27 : vector<1x128xf32> to vector<16x128xf32>
    %29 = arith.addf %26, %28 : vector<16x128xf32>
    %c0_23 = arith.constant 0 : index
    %c0_24 = arith.constant 0 : index
    %30 = vector.load %arg10[%c0_23, %c0_24] : memref<16x128xf32, #tpu.memory_space<vmem>>, vector<16x128xf32>
    tpu.vector_store %arg10[%c0_23, %c0_24], %29 {strides = array<i32>} : memref<16x128xf32, #tpu.memory_space<vmem>>, vector<16x128xf32>,
    return
  }
  func.func @transform_0(%arg0: i32) -> (i32, i32) {
    %c0_i32 = arith.constant 0 : i32
    %c0_i32_0 = arith.constant 0 : i32
    return %arg0, %c0_i32 : i32, i32
  }
  func.func @transform_1(%arg0: i32) -> (i32, i32) {
    %c0_i32 = arith.constant 0 : i32
    %c0_i32_0 = arith.constant 0 : i32
    %c0_i32_1 = arith.constant 0 : i32
    return %c0_i32, %c0_i32_0 : i32, i32
  }
  func.func @transform_2(%arg0: i32) -> (i32, i32) {
    %c0_i32 = arith.constant 0 : i32
    %c0_i32_0 = arith.constant 0 : i32
    %c0_i32_1 = arith.constant 0 : i32
    return %c0_i32, %c0_i32_0 : i32, i32
  }
  func.func @transform_3(%arg0: i32) -> (i32, i32) {
    %c0_i32 = arith.constant 0 : i32
    %c0_i32_0 = arith.constant 0 : i32
    %c0_i32_1 = arith.constant 0 : i32
    return %c0_i32, %c0_i32_0 : i32, i32
  }
  func.func @transform_4(%arg0: i32) -> (i32, i32) {
    %c0_i32 = arith.constant 0 : i32
    %c0_i32_0 = arith.constant 0 : i32
    %c0_i32_1 = arith.constant 0 : i32
    return %c0_i32, %c0_i32_0 : i32, i32
  }
  func.func @transform_5(%arg0: i32) -> (i32, i32) {
    %c0_i32 = arith.constant 0 : i32
    %c0_i32_0 = arith.constant 0 : i32
    %c0_i32_1 = arith.constant 0 : i32
    return %c0_i32, %c0_i32_0 : i32, i32
  }
  func.func @transform_6(%arg0: i32) -> (i32, i32) {
    %c0_i32 = arith.constant 0 : i32
    %c0_i32_0 = arith.constant 0 : i32
    %c0_i32_1 = arith.constant 0 : i32
    return %c0_i32, %c0_i32_0 : i32, i32
  }
  func.func @transform_7(%arg0: i32) -> (i32, i32) {
    %c0_i32 = arith.constant 0 : i32
    %c0_i32_0 = arith.constant 0 : i32
    %c0_i32_1 = arith.constant 0 : i32
    return %c0_i32, %c0_i32_0 : i32, i32
  }
  func.func @transform_8(%arg0: i32) -> (i32, i32) {
    %c0_i32 = arith.constant 0 : i32
    %c0_i32_0 = arith.constant 0 : i32
    %c0_i32_1 = arith.constant 0 : i32
    return %c0_i32, %c0_i32_0 : i32, i32
  }
  func.func @transform_9(%arg0: i32) -> (i32, i32) {
    %c0_i32 = arith.constant 0 : i32
    %c0_i32_0 = arith.constant 0 : i32
    return %arg0, %c0_i32 : i32, i32
  }
}

</mosaic_0001>

<llo_original>
// kernel: dqn_forward.1
$region0: #{dqn_forward.1}
  #allocation0 [shape = 'u32[]', space=smem, size = 0x4, offset = 0x4, fixed_abs, tag = 'smem constant byte address 0x4 - core index']
  #allocation1 [shape = 'u32[144,128]{1,0:T(1,128)}', space=vmem, size = 0x12000, scoped, tag = 'internal scratch']
  %s0 = inlined_call_operand.vmem [shape: bf16[16,128], index: 0, kind: input, shape index: {}]
  %s1 = inlined_call_operand.hbm [shape: bf16[128,512], index: 1, kind: input, shape index: {}]
  %s2 = inlined_call_operand.vmem [shape: f32[1,512], index: 2, kind: input, shape index: {}]
  %s3 = inlined_call_operand.hbm [shape: bf16[512,256], index: 3, kind: input, shape index: {}]
  %s4 = inlined_call_operand.vmem [shape: f32[1,256], index: 4, kind: input, shape index: {}]
  %s5 = inlined_call_operand.hbm [shape: bf16[256,128], index: 5, kind: input, shape index: {}]
  %s6 = inlined_call_operand.vmem [shape: f32[1,128], index: 6, kind: input, shape index: {}]
  %s7 = inlined_call_operand.hbm [shape: bf16[128,128], index: 7, kind: input, shape index: {}]
  %s8 = inlined_call_operand.vmem [shape: f32[1,128], index: 8, kind: input, shape index: {}]
  %s9 = inlined_call_operand.vmem [shape: f32[16,128], index: 9, kind: output, shape index: {}]
  %s10 = sld [smem:[#allocation0]]
  $region62: #{dqn_forward.1} parent=0
    _
  %s12 = ssub.s32 1, %s10
  %s13 = scalar_select 0, %s12, %s10
  $region1: #{dqn_forward.1} parent=0
    #allocation2 [shape = 'u8[131072]{0}', space=vmem, size = 0x20000, scoped, tag = 'input window, operand 1, single buffered']
    #allocation3 [shape = 's32[1]{0}', space=sflag, size = 0x4, scoped, tag = 'scoped memory for dqn_forward.1']
    #allocation4 [shape = 'u8[262144]{0}', space=vmem, size = 0x40000, scoped, tag = 'input window, operand 3, single buffered']
    #allocation5 [shape = 's32[1]{0}', space=sflag, size = 0x4, scoped, tag = 'scoped memory for dqn_forward.1']
    #allocation6 [shape = 'u8[65536]{0}', space=vmem, size = 0x10000, scoped, tag = 'input window, operand 5, single buffered']
    #allocation7 [shape = 'u8[32768]{0}', space=vmem, size = 0x8000, scoped, tag = 'input window, operand 7, single buffered']
    #allocation8 [shape = 's32[1]{0}', space=sflag, size = 0x4, scoped, tag = 'scoped memory for dqn_forward.1']
    %14 = vsyncpa [#allocation3], 0
    %15 = vsyncpa [#allocation5], 0
    %16 = vsyncpa [#allocation8], 0
    // Predicated region
    $region2: #{dqn_forward.1} parent=1 // pred_check
      _
    $region3: #{dqn_forward.1} parent=1 // pred_check_branch
      %18 = sbr.rel (0) target = $region5
    $region4: #{dqn_forward.1} parent=1 // pred_region
      _
    $region5: #{dqn_forward.1} parent=1 // pred_fallthru
      _
    // Predicated region
    $region6: #{dqn_forward.1} parent=1 // pred_check
      _
    $region7: #{dqn_forward.1} parent=1 // pred_check_branch
      %20 = sbr.rel (0) target = $region9
    $region8: #{dqn_forward.1} parent=1 // pred_region
      %s22 = ssub.s32 4096, 4096
      %23 = vsyncadd [#allocation3], %s22
      %s24 = sshll.u32 [#allocation2], 4
      %s25 = int_to_ptr.vmem [resolvable:$true] %s24
      %30 = dma.hbm_to_vmem [thread:$0]  %s1, 4096, %s25, [#allocation3], 256, 256, 16
    $region9: #{dqn_forward.1} parent=1 // pred_fallthru
      _
    // Predicated region
    $region10: #{dqn_forward.1} parent=1 // pred_check
      _
    $region11: #{dqn_forward.1} parent=1 // pred_check_branch
      %32 = sbr.rel (0) target = $region13
    $region12: #{dqn_forward.1} parent=1 // pred_region
      _
    $region13: #{dqn_forward.1} parent=1 // pred_fallthru
      _
    // Predicated region
    $region14: #{dqn_forward.1} parent=1 // pred_check
      _
    $region15: #{dqn_forward.1} parent=1 // pred_check_branch
      %34 = sbr.rel (0) target = $region17
    $region16: #{dqn_forward.1} parent=1 // pred_region
      %s36 = ssub.s32 8192, 8192
      %37 = vsyncadd [#allocation5], %s36
      %s38 = sshll.u32 [#allocation4], 4
      %s39 = int_to_ptr.vmem [resolvable:$true] %s38
      %44 = dma.hbm_to_vmem [thread:$0]  %s3, 8192, %s39, [#allocation5], 128, 128, 8
    $region17: #{dqn_forward.1} parent=1 // pred_fallthru
      _
    // Predicated region
    $region18: #{dqn_forward.1} parent=1 // pred_check
      _
    $region19: #{dqn_forward.1} parent=1 // pred_check_branch
      %46 = sbr.rel (0) target = $region21
    $region20: #{dqn_forward.1} parent=1 // pred_region
      _
    $region21: #{dqn_forward.1} parent=1 // pred_fallthru
      _
    // Predicated region
    $region22: #{dqn_forward.1} parent=1 // pred_check
      _
    $region23: #{dqn_forward.1} parent=1 // pred_check_branch
      %48 = sbr.rel (0) target = $region25
    $region24: #{dqn_forward.1} parent=1 // pred_region
      %s50 = ssub.s32 2048, 2048
      %51 = vsyncadd [#allocation5], %s50
      %s52 = sshll.u32 [#allocation6], 4
      %s53 = int_to_ptr.vmem [resolvable:$true] %s52
      %58 = dma.hbm_to_vmem [thread:$0]  %s5, 2048, %s53, [#allocation5], 64, 64, 4
    $region25: #{dqn_forward.1} parent=1 // pred_fallthru
      _
    // Predicated region
    $region26: #{dqn_forward.1} parent=1 // pred_check
      _
    $region27: #{dqn_forward.1} parent=1 // pred_check_branch
      %60 = sbr.rel (0) target = $region29
    $region28: #{dqn_forward.1} parent=1 // pred_region
      _
    $region29: #{dqn_forward.1} parent=1 // pred_fallthru
      _
    // Predicated region
    $region30: #{dqn_forward.1} parent=1 // pred_check
      _
    $region31: #{dqn_forward.1} parent=1 // pred_check_branch
      %62 = sbr.rel (0) target = $region33
    $region32: #{dqn_forward.1} parent=1 // pred_region
      %s64 = ssub.s32 1024, 1024
      %65 = vsyncadd [#allocation8], %s64
      %s66 = sshll.u32 [#allocation7], 4
      %s67 = int_to_ptr.vmem [resolvable:$true] %s66
      %72 = dma.hbm_to_vmem [thread:$0]  %s7, 1024, %s67, [#allocation8], 64, 64, 4
    $region33: #{dqn_forward.1} parent=1 // pred_fallthru
      _
    // Predicated region
    $region34: #{dqn_forward.1} parent=1 // pred_check
      _
    $region35: #{dqn_forward.1} parent=1 // pred_check_branch
      %74 = sbr.rel (0) target = $region37
    $region36: #{dqn_forward.1} parent=1 // pred_region
      _
    $region37: #{dqn_forward.1} parent=1 // pred_fallthru
      _
    // Predicated region
    $region38: #{dqn_forward.1} parent=1 // pred_check
      _
    $region39: #{dqn_forward.1} parent=1 // pred_check_branch
      %76 = sbr.rel (0) target = $region41
    $region40: #{dqn_forward.1} parent=1 // pred_region
      %77 = dma.done [#allocation3], 4096
    $region41: #{dqn_forward.1} parent=1 // pred_fallthru
      _
    // Predicated region
    $region42: #{dqn_forward.1} parent=1 // pred_check
      _
    $region43: #{dqn_forward.1} parent=1 // pred_check_branch
      %79 = sbr.rel (0) target = $region45
    $region44: #{dqn_forward.1} parent=1 // pred_region
      %80 = dma.done [#allocation5], 8192
    $region45: #{dqn_forward.1} parent=1 // pred_fallthru
      _
    // Predicated region
    $region46: #{dqn_forward.1} parent=1 // pred_check
      _
    $region47: #{dqn_forward.1} parent=1 // pred_check_branch
      %82 = sbr.rel (0) target = $region49
    $region48: #{dqn_forward.1} parent=1 // pred_region
      %83 = dma.done [#allocation5], 2048
    $region49: #{dqn_forward.1} parent=1 // pred_fallthru
      _
    // Predicated region
    $region50: #{dqn_forward.1} parent=1 // pred_check
      _
    $region51: #{dqn_forward.1} parent=1 // pred_check_branch
      %85 = sbr.rel (0) target = $region53
    $region52: #{dqn_forward.1} parent=1 // pred_region
      %86 = dma.done [#allocation8], 1024
    $region53: #{dqn_forward.1} parent=1 // pred_fallthru
      _
    %v88 = vld [vmem:[%s0] sm:$0xf]
    %v89 = vld [vmem:[%s0 + $0x4] sm:$0xf]
    %v90 = vld [vmem:[#allocation2] sm:$0xff]
    %v91 = vld [vmem:[#allocation2 + $0x8] sm:$0xff]
    %v92 = vld [vmem:[#allocation2 + $0x10] sm:$0xff]
    %v93 = vld [vmem:[#allocation2 + $0x18] sm:$0xff]
    %v94 = vld [vmem:[#allocation2 + $0x20] sm:$0xff]
    %v95 = vld [vmem:[#allocation2 + $0x28] sm:$0xff]
    %v96 = vld [vmem:[#allocation2 + $0x30] sm:$0xff]
    %v97 = vld [vmem:[#allocation2 + $0x38] sm:$0xff]
    %v98 = vld [vmem:[#allocation2 + $0x40] sm:$0xff]
    %v99 = vld [vmem:[#allocation2 + $0x48] sm:$0xff]
    %v100 = vld [vmem:[#allocation2 + $0x50] sm:$0xff]
    %v101 = vld [vmem:[#allocation2 + $0x58] sm:$0xff]
    %v102 = vld [vmem:[#allocation2 + $0x60] sm:$0xff]
    %v103 = vld [vmem:[#allocation2 + $0x68] sm:$0xff]
    %v104 = vld [vmem:[#allocation2 + $0x70] sm:$0xff]
    %v105 = vld [vmem:[#allocation2 + $0x78] sm:$0xff]
    %v106 = vld [vmem:[#allocation2 + $0x80] sm:$0xff]
    %v107 = vld [vmem:[#allocation2 + $0x88] sm:$0xff]
    %v108 = vld [vmem:[#allocation2 + $0x90] sm:$0xff]
    %v109 = vld [vmem:[#allocation2 + $0x98] sm:$0xff]
    %v110 = vld [vmem:[#allocation2 + $0xa0] sm:$0xff]
    %v111 = vld [vmem:[#allocation2 + $0xa8] sm:$0xff]
    %v112 = vld [vmem:[#allocation2 + $0xb0] sm:$0xff]
    %v113 = vld [vmem:[#allocation2 + $0xb8] sm:$0xff]
    %v114 = vld [vmem:[#allocation2 + $0xc0] sm:$0xff]
    %v115 = vld [vmem:[#allocation2 + $0xc8] sm:$0xff]
    %v116 = vld [vmem:[#allocation2 + $0xd0] sm:$0xff]
    %v117 = vld [vmem:[#allocation2 + $0xd8] sm:$0xff]
    %v118 = vld [vmem:[#allocation2 + $0xe0] sm:$0xff]
    %v119 = vld [vmem:[#allocation2 + $0xe8] sm:$0xff]
    %v120 = vld [vmem:[#allocation2 + $0xf0] sm:$0xff]
    %v121 = vld [vmem:[#allocation2 + $0xf8] sm:$0xff]
    %v122 = vld [vmem:[%s2] sm:$0xf]
    %v124 = vlaneseq
    %v125 = vshrl.u32 %v124, 7
    %v126 = vsub.s32 0, %v125
    %v127 = vrot.slane %v122, %v126
    %v128 = vlaneseq
    %v129 = vshrl.u32 %v128, 7
    %v130 = vsub.s32 1, %v129
    %v131 = vrot.slane %v122, %v130
    %v132 = vlaneseq
    %v133 = vshrl.u32 %v132, 7
    %v134 = vsub.s32 2, %v133
    %v135 = vrot.slane %v122, %v134
    %v136 = vlaneseq
    %v137 = vshrl.u32 %v136, 7
    %v138 = vsub.s32 3, %v137
    %v139 = vrot.slane %v122, %v138
    %v146 = vunpack.c.l.b16 %v88
    %v147 = vunpack.c.l.b16 %v89
    %v148 = vpack.c.b16 %v147, %v146
    %v182 = vunpack.c.l.b16 %v90
    %v183 = vunpack.c.h.b16 %v90
    %v184 = vunpack.c.l.b16 %v91
    %v185 = vunpack.c.h.b16 %v91
    %v186 = vunpack.c.l.b16 %v92
    %v187 = vunpack.c.h.b16 %v92
    %v188 = vunpack.c.l.b16 %v93
    %v189 = vunpack.c.h.b16 %v93
    %v190 = vunpack.c.l.b16 %v94
    %v191 = vunpack.c.h.b16 %v94
    %v192 = vunpack.c.l.b16 %v95
    %v193 = vunpack.c.h.b16 %v95
    %v194 = vunpack.c.l.b16 %v96
    %v195 = vunpack.c.h.b16 %v96
    %v196 = vunpack.c.l.b16 %v97
    %v197 = vunpack.c.h.b16 %v97
    %v198 = vunpack.c.l.b16 %v98
    %v199 = vunpack.c.h.b16 %v98
    %v200 = vunpack.c.l.b16 %v99
    %v201 = vunpack.c.h.b16 %v99
    %v202 = vunpack.c.l.b16 %v100
    %v203 = vunpack.c.h.b16 %v100
    %v204 = vunpack.c.l.b16 %v101
    %v205 = vunpack.c.h.b16 %v101
    %v206 = vunpack.c.l.b16 %v102
    %v207 = vunpack.c.h.b16 %v102
    %v208 = vunpack.c.l.b16 %v103
    %v209 = vunpack.c.h.b16 %v103
    %v210 = vunpack.c.l.b16 %v104
    %v211 = vunpack.c.h.b16 %v104
    %v212 = vunpack.c.l.b16 %v105
    %v213 = vunpack.c.h.b16 %v105
    %v214 = vunpack.c.l.b16 %v106
    %v215 = vunpack.c.h.b16 %v106
    %v216 = vunpack.c.l.b16 %v107
    %v217 = vunpack.c.h.b16 %v107
    %v218 = vunpack.c.l.b16 %v108
    %v219 = vunpack.c.h.b16 %v108
    %v220 = vunpack.c.l.b16 %v109
    %v221 = vunpack.c.h.b16 %v109
    %v222 = vunpack.c.l.b16 %v110
    %v223 = vunpack.c.h.b16 %v110
    %v224 = vunpack.c.l.b16 %v111
    %v225 = vunpack.c.h.b16 %v111
    %v226 = vunpack.c.l.b16 %v112
    %v227 = vunpack.c.h.b16 %v112
    %v228 = vunpack.c.l.b16 %v113
    %v229 = vunpack.c.h.b16 %v113
    %v230 = vunpack.c.l.b16 %v114
    %v231 = vunpack.c.h.b16 %v114
    %v232 = vunpack.c.l.b16 %v115
    %v233 = vunpack.c.h.b16 %v115
    %v234 = vunpack.c.l.b16 %v116
    %v235 = vunpack.c.h.b16 %v116
    %v236 = vunpack.c.l.b16 %v117
    %v237 = vunpack.c.h.b16 %v117
    %v238 = vunpack.c.l.b16 %v118
    %v239 = vunpack.c.h.b16 %v118
    %v240 = vunpack.c.l.b16 %v119
    %v241 = vunpack.c.h.b16 %v119
    %v242 = vunpack.c.l.b16 %v120
    %v243 = vunpack.c.h.b16 %v120
    %v244 = vunpack.c.l.b16 %v121
    %v245 = vunpack.c.h.b16 %v121
    %v246 = vpack.c.b16 %v186, %v182
    %v247 = vpack.c.b16 %v187, %v183
    %v248 = vpack.c.b16 %v188, %v184
    %v249 = vpack.c.b16 %v189, %v185
    %v250 = vpack.c.b16 %v194, %v190
    %v251 = vpack.c.b16 %v195, %v191
    %v252 = vpack.c.b16 %v196, %v192
    %v253 = vpack.c.b16 %v197, %v193
    %v254 = vpack.c.b16 %v202, %v198
    %v255 = vpack.c.b16 %v203, %v199
    %v256 = vpack.c.b16 %v204, %v200
    %v257 = vpack.c.b16 %v205, %v201
    %v258 = vpack.c.b16 %v210, %v206
    %v259 = vpack.c.b16 %v211, %v207
    %v260 = vpack.c.b16 %v212, %v208
    %v261 = vpack.c.b16 %v213, %v209
    %v262 = vpack.c.b16 %v218, %v214
    %v263 = vpack.c.b16 %v219, %v215
    %v264 = vpack.c.b16 %v220, %v216
    %v265 = vpack.c.b16 %v221, %v217
    %v266 = vpack.c.b16 %v226, %v222
    %v267 = vpack.c.b16 %v227, %v223
    %v268 = vpack.c.b16 %v228, %v224
    %v269 = vpack.c.b16 %v229, %v225
    %v270 = vpack.c.b16 %v234, %v230
    %v271 = vpack.c.b16 %v235, %v231
    %v272 = vpack.c.b16 %v236, %v232
    %v273 = vpack.c.b16 %v237, %v233
    %v274 = vpack.c.b16 %v242, %v238
    %v275 = vpack.c.b16 %v243, %v239
    %v276 = vpack.c.b16 %v244, %v240
    %v277 = vpack.c.b16 %v245, %v241
    %310 = vmatprep.subr.bf16.mxu0 %v247
    %311 = vmatpush1.bf16.msra.mxu0 %v246
    %312 = vmatprep.subr.bf16.mxu0 %v251
    %313 = vmatpush1.bf16.msra.mxu0 %v250
    %314 = vmatprep.subr.bf16.mxu0 %v255
    %315 = vmatpush1.bf16.msra.mxu0 %v254
    %316 = vmatprep.subr.bf16.mxu0 %v259
    %317 = vmatpush1.bf16.msra.mxu0 %v258
    %318 = vmatprep.subr.bf16.mxu0 %v263
    %319 = vmatpush1.bf16.msra.mxu0 %v262
    %320 = vmatprep.subr.bf16.mxu0 %v267
    %321 = vmatpush1.bf16.msra.mxu0 %v266
    %322 = vmatprep.subr.bf16.mxu0 %v271
    %323 = vmatpush1.bf16.msra.mxu0 %v270
    %324 = vmatprep.subr.bf16.mxu0 %v275
    %325 = vmatpush1.bf16.msra.mxu0 %v274
    %326 = vmatprep.subr.bf16.mxu0 0
    %327 = vmatpush1.bf16.msra.mxu0 0
    %328 = vmatprep.subr.bf16.mxu0 0
    %329 = vmatpush1.bf16.msra.mxu0 0
    %330 = vmatprep.subr.bf16.mxu0 0
    %331 = vmatpush1.bf16.msra.mxu0 0
    %332 = vmatprep.subr.bf16.mxu0 0
    %333 = vmatpush1.bf16.msra.mxu0 0
    %334 = vmatprep.subr.bf16.mxu0 0
    %335 = vmatpush1.bf16.msra.mxu0 0
    %336 = vmatprep.subr.bf16.mxu0 0
    %337 = vmatpush1.bf16.msra.mxu0 0
    %338 = vmatprep.subr.bf16.mxu0 0
    %339 = vmatpush1.bf16.msra.mxu0 0
    %340 = vmatprep.subr.bf16.mxu0 0
    %341 = vmatpush1.bf16.msra.mxu0 0
    %342 = vmatprep.mubr.bf16.mxu0 0
    %343 = vmatmul.mubr.bf16.gmra.mrb[0].mxu0 %v148
    %v344 = vpop.f32.mrb[0].mxu0
    %v345 = vadd.f32 %v127, %v344
    %v346 = vpop.f32.mrb[0].mxu0
    %v347 = vadd.f32 %v131, %v346
    %v348 = vpop.f32.mrb[0].mxu0
    %v349 = vadd.f32 %v127, %v348
    %v350 = vpop.f32.mrb[0].mxu0
    %v351 = vadd.f32 %v131, %v350
    %352 = vdwg.mxu0
    %353 = vmatprep.subr.bf16.mxu0 %v249
    %354 = vmatpush1.bf16.msra.mxu0 %v248
    %355 = vmatprep.subr.bf16.mxu0 %v253
    %356 = vmatpush1.bf16.msra.mxu0 %v252
    %357 = vmatprep.subr.bf16.mxu0 %v257
    %358 = vmatpush1.bf16.msra.mxu0 %v256
    %359 = vmatprep.subr.bf16.mxu0 %v261
    %360 = vmatpush1.bf16.msra.mxu0 %v260
    %361 = vmatprep.subr.bf16.mxu0 %v265
    %362 = vmatpush1.bf16.msra.mxu0 %v264
    %363 = vmatprep.subr.bf16.mxu0 %v269
    %364 = vmatpush1.bf16.msra.mxu0 %v268
    %365 = vmatprep.subr.bf16.mxu0 %v273
    %366 = vmatpush1.bf16.msra.mxu0 %v272
    %367 = vmatprep.subr.bf16.mxu0 %v277
    %368 = vmatpush1.bf16.msra.mxu0 %v276
    %369 = vmatprep.subr.bf16.mxu0 0
    %370 = vmatpush1.bf16.msra.mxu0 0
    %371 = vmatprep.subr.bf16.mxu0 0
    %372 = vmatpush1.bf16.msra.mxu0 0
    %373 = vmatprep.subr.bf16.mxu0 0
    %374 = vmatpush1.bf16.msra.mxu0 0
    %375 = vmatprep.subr.bf16.mxu0 0
    %376 = vmatpush1.bf16.msra.mxu0 0
    %377 = vmatprep.subr.bf16.mxu0 0
    %378 = vmatpush1.bf16.msra.mxu0 0
    %379 = vmatprep.subr.bf16.mxu0 0
    %380 = vmatpush1.bf16.msra.mxu0 0
    %381 = vmatprep.subr.bf16.mxu0 0
    %382 = vmatpush1.bf16.msra.mxu0 0
    %383 = vmatprep.subr.bf16.mxu0 0
    %384 = vmatpush1.bf16.msra.mxu0 0
    %385 = vmatprep.mubr.bf16.mxu0 0
    %386 = vmatmul.mubr.bf16.gmra.mrb[0].mxu0 %v148
    %v387 = vpop.f32.mrb[0].mxu0
    %v388 = vadd.f32 %v135, %v387
    %v389 = vpop.f32.mrb[0].mxu0
    %v390 = vadd.f32 %v139, %v389
    %v391 = vpop.f32.mrb[0].mxu0
    %v392 = vadd.f32 %v135, %v391
    %v393 = vpop.f32.mrb[0].mxu0
    %v394 = vadd.f32 %v139, %v393
    %395 = vdwg.mxu0
    %v396 = vmax.f32 %v345, 0.0
    %v397 = vmax.f32 %v347, 0.0
    %v398 = vmax.f32 %v388, 0.0
    %v399 = vmax.f32 %v390, 0.0
    %v400 = vmax.f32 %v349, 0.0
    %v401 = vmax.f32 %v351, 0.0
    %v402 = vmax.f32 %v392, 0.0
    %v403 = vmax.f32 %v394, 0.0
    %v404 = vpack.c.bf16 %v400, %v396
    %v405 = vpack.c.bf16 %v401, %v397
    %v406 = vpack.c.bf16 %v402, %v398
    %v407 = vpack.c.bf16 %v403, %v399
    %v408 = vld [vmem:[#allocation4] sm:$0xff]
    %v409 = vld [vmem:[#allocation4 + $0x8] sm:$0xff]
    %v410 = vld [vmem:[#allocation4 + $0x10] sm:$0xff]
    %v411 = vld [vmem:[#allocation4 + $0x18] sm:$0xff]
    %v412 = vld [vmem:[#allocation4 + $0x20] sm:$0xff]
    %v413 = vld [vmem:[#allocation4 + $0x28] sm:$0xff]
    %v414 = vld [vmem:[#allocation4 + $0x30] sm:$0xff]
    %v415 = vld [vmem:[#allocation4 + $0x38] sm:$0xff]
    %v416 = vld [vmem:[#allocation4 + $0x40] sm:$0xff]
    %v417 = vld [vmem:[#allocation4 + $0x48] sm:$0xff]
    %v418 = vld [vmem:[#allocation4 + $0x50] sm:$0xff]
    %v419 = vld [vmem:[#allocation4 + $0x58] sm:$0xff]
    %v420 = vld [vmem:[#allocation4 + $0x60] sm:$0xff]
    %v421 = vld [vmem:[#allocation4 + $0x68] sm:$0xff]
    %v422 = vld [vmem:[#allocation4 + $0x70] sm:$0xff]
    %v423 = vld [vmem:[#allocation4 + $0x78] sm:$0xff]
    %v424 = vld [vmem:[#allocation4 + $0x80] sm:$0xff]
    %v425 = vld [vmem:[#allocation4 + $0x88] sm:$0xff]
    %v426 = vld [vmem:[#allocation4 + $0x90] sm:$0xff]
    %v427 = vld [vmem:[#allocation4 + $0x98] sm:$0xff]
    %v428 = vld [vmem:[#allocation4 + $0xa0] sm:$0xff]
    %v429 = vld [vmem:[#allocation4 + $0xa8] sm:$0xff]
    %v430 = vld [vmem:[#allocation4 + $0xb0] sm:$0xff]
    %v431 = vld [vmem:[#allocation4 + $0xb8] sm:$0xff]
    %v432 = vld [vmem:[#allocation4 + $0xc0] sm:$0xff]
    %v433 = vld [vmem:[#allocation4 + $0xc8] sm:$0xff]
    %v434 = vld [vmem:[#allocation4 + $0xd0] sm:$0xff]
    %v435 = vld [vmem:[#allocation4 + $0xd8] sm:$0xff]
    %v436 = vld [vmem:[#allocation4 + $0xe0] sm:$0xff]
    %v437 = vld [vmem:[#allocation4 + $0xe8] sm:$0xff]
    %v438 = vld [vmem:[#allocation4 + $0xf0] sm:$0xff]
    %v439 = vld [vmem:[#allocation4 + $0xf8] sm:$0xff]
    %v440 = vld [vmem:[#allocation4 + $0x100] sm:$0xff]
    %v441 = vld [vmem:[#allocation4 + $0x108] sm:$0xff]
    %v442 = vld [vmem:[#allocation4 + $0x110] sm:$0xff]
    %v443 = vld [vmem:[#allocation4 + $0x118] sm:$0xff]
    %v444 = vld [vmem:[#allocation4 + $0x120] sm:$0xff]
    %v445 = vld [vmem:[#allocation4 + $0x128] sm:$0xff]
    %v446 = vld [vmem:[#allocation4 + $0x130] sm:$0xff]
    %v447 = vld [vmem:[#allocation4 + $0x138] sm:$0xff]
    %v448 = vld [vmem:[#allocation4 + $0x140] sm:$0xff]
    %v449 = vld [vmem:[#allocation4 + $0x148] sm:$0xff]
    %v450 = vld [vmem:[#allocation4 + $0x150] sm:$0xff]
    %v451 = vld [vmem:[#allocation4 + $0x158] sm:$0xff]
    %v452 = vld [vmem:[#allocation4 + $0x160] sm:$0xff]
    %v453 = vld [vmem:[#allocation4 + $0x168] sm:$0xff]
    %v454 = vld [vmem:[#allocation4 + $0x170] sm:$0xff]
    %v455 = vld [vmem:[#allocation4 + $0x178] sm:$0xff]
    %v456 = vld [vmem:[#allocation4 + $0x180] sm:$0xff]
    %v457 = vld [vmem:[#allocation4 + $0x188] sm:$0xff]
    %v458 = vld [vmem:[#allocation4 + $0x190] sm:$0xff]
    %v459 = vld [vmem:[#allocation4 + $0x198] sm:$0xff]
    %v460 = vld [vmem:[#allocation4 + $0x1a0] sm:$0xff]
    %v461 = vld [vmem:[#allocation4 + $0x1a8] sm:$0xff]
    %v462 = vld [vmem:[#allocation4 + $0x1b0] sm:$0xff]
    %v463 = vld [vmem:[#allocation4 + $0x1b8] sm:$0xff]
    %v464 = vld [vmem:[#allocation4 + $0x1c0] sm:$0xff]
    %v465 = vld [vmem:[#allocation4 + $0x1c8] sm:$0xff]
    %v466 = vld [vmem:[#allocation4 + $0x1d0] sm:$0xff]
    %v467 = vld [vmem:[#allocation4 + $0x1d8] sm:$0xff]
    %v468 = vld [vmem:[#allocation4 + $0x1e0] sm:$0xff]
    %v469 = vld [vmem:[#allocation4 + $0x1e8] sm:$0xff]
    %v470 = vld [vmem:[#allocation4 + $0x1f0] sm:$0xff]
    %v471 = vld [vmem:[#allocation4 + $0x1f8] sm:$0xff]
    %v472 = vld [vmem:[%s4] sm:$0x3]
    %v474 = vlaneseq
    %v475 = vshrl.u32 %v474, 7
    %v476 = vsub.s32 0, %v475
    %v477 = vrot.slane %v472, %v476
    %v478 = vlaneseq
    %v479 = vshrl.u32 %v478, 7
    %v480 = vsub.s32 1, %v479
    %v481 = vrot.slane %v472, %v480
    %v548 = vunpack.c.l.b16 %v408
    %v549 = vunpack.c.h.b16 %v408
    %v550 = vunpack.c.l.b16 %v409
    %v551 = vunpack.c.h.b16 %v409
    %v552 = vunpack.c.l.b16 %v410
    %v553 = vunpack.c.h.b16 %v410
    %v554 = vunpack.c.l.b16 %v411
    %v555 = vunpack.c.h.b16 %v411
    %v556 = vunpack.c.l.b16 %v412
    %v557 = vunpack.c.h.b16 %v412
    %v558 = vunpack.c.l.b16 %v413
    %v559 = vunpack.c.h.b16 %v413
    %v560 = vunpack.c.l.b16 %v414
    %v561 = vunpack.c.h.b16 %v414
    %v562 = vunpack.c.l.b16 %v415
    %v563 = vunpack.c.h.b16 %v415
    %v564 = vunpack.c.l.b16 %v416
    %v565 = vunpack.c.h.b16 %v416
    %v566 = vunpack.c.l.b16 %v417
    %v567 = vunpack.c.h.b16 %v417
    %v568 = vunpack.c.l.b16 %v418
    %v569 = vunpack.c.h.b16 %v418
    %v570 = vunpack.c.l.b16 %v419
    %v571 = vunpack.c.h.b16 %v419
    %v572 = vunpack.c.l.b16 %v420
    %v573 = vunpack.c.h.b16 %v420
    %v574 = vunpack.c.l.b16 %v421
    %v575 = vunpack.c.h.b16 %v421
    %v576 = vunpack.c.l.b16 %v422
    %v577 = vunpack.c.h.b16 %v422
    %v578 = vunpack.c.l.b16 %v423
    %v579 = vunpack.c.h.b16 %v423
    %v580 = vunpack.c.l.b16 %v424
    %v581 = vunpack.c.h.b16 %v424
    %v582 = vunpack.c.l.b16 %v425
    %v583 = vunpack.c.h.b16 %v425
    %v584 = vunpack.c.l.b16 %v426
    %v585 = vunpack.c.h.b16 %v426
    %v586 = vunpack.c.l.b16 %v427
    %v587 = vunpack.c.h.b16 %v427
    %v588 = vunpack.c.l.b16 %v428
    %v589 = vunpack.c.h.b16 %v428
    %v590 = vunpack.c.l.b16 %v429
    %v591 = vunpack.c.h.b16 %v429
    %v592 = vunpack.c.l.b16 %v430
    %v593 = vunpack.c.h.b16 %v430
    %v594 = vunpack.c.l.b16 %v431
    %v595 = vunpack.c.h.b16 %v431
    %v596 = vunpack.c.l.b16 %v432
    %v597 = vunpack.c.h.b16 %v432
    %v598 = vunpack.c.l.b16 %v433
    %v599 = vunpack.c.h.b16 %v433
    %v600 = vunpack.c.l.b16 %v434
    %v601 = vunpack.c.h.b16 %v434
    %v602 = vunpack.c.l.b16 %v435
    %v603 = vunpack.c.h.b16 %v435
    %v604 = vunpack.c.l.b16 %v436
    %v605 = vunpack.c.h.b16 %v436
    %v606 = vunpack.c.l.b16 %v437
    %v607 = vunpack.c.h.b16 %v437
    %v608 = vunpack.c.l.b16 %v438
    %v609 = vunpack.c.h.b16 %v438
    %v610 = vunpack.c.l.b16 %v439
    %v611 = vunpack.c.h.b16 %v439
    %v612 = vunpack.c.l.b16 %v440
    %v613 = vunpack.c.h.b16 %v440
    %v614 = vunpack.c.l.b16 %v441
    %v615 = vunpack.c.h.b16 %v441
    %v616 = vunpack.c.l.b16 %v442
    %v617 = vunpack.c.h.b16 %v442
    %v618 = vunpack.c.l.b16 %v443
    %v619 = vunpack.c.h.b16 %v443
    %v620 = vunpack.c.l.b16 %v444
    %v621 = vunpack.c.h.b16 %v444
    %v622 = vunpack.c.l.b16 %v445
    %v623 = vunpack.c.h.b16 %v445
    %v624 = vunpack.c.l.b16 %v446
    %v625 = vunpack.c.h.b16 %v446
    %v626 = vunpack.c.l.b16 %v447
    %v627 = vunpack.c.h.b16 %v447
    %v628 = vunpack.c.l.b16 %v448
    %v629 = vunpack.c.h.b16 %v448
    %v630 = vunpack.c.l.b16 %v449
    %v631 = vunpack.c.h.b16 %v449
    %v632 = vunpack.c.l.b16 %v450
    %v633 = vunpack.c.h.b16 %v450
    %v634 = vunpack.c.l.b16 %v451
    %v635 = vunpack.c.h.b16 %v451
    %v636 = vunpack.c.l.b16 %v452
    %v637 = vunpack.c.h.b16 %v452
    %v638 = vunpack.c.l.b16 %v453
    %v639 = vunpack.c.h.b16 %v453
    %v640 = vunpack.c.l.b16 %v454
    %v641 = vunpack.c.h.b16 %v454
    %v642 = vunpack.c.l.b16 %v455
    %v643 = vunpack.c.h.b16 %v455
    %v644 = vunpack.c.l.b16 %v456
    %v645 = vunpack.c.h.b16 %v456
    %v646 = vunpack.c.l.b16 %v457
    %v647 = vunpack.c.h.b16 %v457
    %v648 = vunpack.c.l.b16 %v458
    %v649 = vunpack.c.h.b16 %v458
    %v650 = vunpack.c.l.b16 %v459
    %v651 = vunpack.c.h.b16 %v459
    %v652 = vunpack.c.l.b16 %v460
    %v653 = vunpack.c.h.b16 %v460
    %v654 = vunpack.c.l.b16 %v461
    %v655 = vunpack.c.h.b16 %v461
    %v656 = vunpack.c.l.b16 %v462
    %v657 = vunpack.c.h.b16 %v462
    %v658 = vunpack.c.l.b16 %v463
    %v659 = vunpack.c.h.b16 %v463
    %v660 = vunpack.c.l.b16 %v464
    %v661 = vunpack.c.h.b16 %v464
    %v662 = vunpack.c.l.b16 %v465
    %v663 = vunpack.c.h.b16 %v465
    %v664 = vunpack.c.l.b16 %v466
    %v665 = vunpack.c.h.b16 %v466
    %v666 = vunpack.c.l.b16 %v467
    %v667 = vunpack.c.h.b16 %v467
    %v668 = vunpack.c.l.b16 %v468
    %v669 = vunpack.c.h.b16 %v468
    %v670 = vunpack.c.l.b16 %v469
    %v671 = vunpack.c.h.b16 %v469
    %v672 = vunpack.c.l.b16 %v470
    %v673 = vunpack.c.h.b16 %v470
    %v674 = vunpack.c.l.b16 %v471
    %v675 = vunpack.c.h.b16 %v471
    %v676 = vpack.c.b16 %v550, %v548
    %v677 = vpack.c.b16 %v551, %v549
    %v678 = vpack.c.b16 %v554, %v552
    %v679 = vpack.c.b16 %v555, %v553
    %v680 = vpack.c.b16 %v558, %v556
    %v681 = vpack.c.b16 %v559, %v557
    %v682 = vpack.c.b16 %v562, %v560
    %v683 = vpack.c.b16 %v563, %v561
    %v684 = vpack.c.b16 %v566, %v564
    %v685 = vpack.c.b16 %v567, %v565
    %v686 = vpack.c.b16 %v570, %v568
    %v687 = vpack.c.b16 %v571, %v569
    %v688 = vpack.c.b16 %v574, %v572
    %v689 = vpack.c.b16 %v575, %v573
    %v690 = vpack.c.b16 %v578, %v576
    %v691 = vpack.c.b16 %v579, %v577
    %v692 = vpack.c.b16 %v582, %v580
    %v693 = vpack.c.b16 %v583, %v581
    %v694 = vpack.c.b16 %v586, %v584
    %v695 = vpack.c.b16 %v587, %v585
    %v696 = vpack.c.b16 %v590, %v588
    %v697 = vpack.c.b16 %v591, %v589
    %v698 = vpack.c.b16 %v594, %v592
    %v699 = vpack.c.b16 %v595, %v593
    %v700 = vpack.c.b16 %v598, %v596
    %v701 = vpack.c.b16 %v599, %v597
    %v702 = vpack.c.b16 %v602, %v600
    %v703 = vpack.c.b16 %v603, %v601
    %v704 = vpack.c.b16 %v606, %v604
    %v705 = vpack.c.b16 %v607, %v605
    %v706 = vpack.c.b16 %v610, %v608
    %v707 = vpack.c.b16 %v611, %v609
    %v708 = vpack.c.b16 %v614, %v612
    %v709 = vpack.c.b16 %v615, %v613
    %v710 = vpack.c.b16 %v618, %v616
    %v711 = vpack.c.b16 %v619, %v617
    %v712 = vpack.c.b16 %v622, %v620
    %v713 = vpack.c.b16 %v623, %v621
    %v714 = vpack.c.b16 %v626, %v624
    %v715 = vpack.c.b16 %v627, %v625
    %v716 = vpack.c.b16 %v630, %v628
    %v717 = vpack.c.b16 %v631, %v629
    %v718 = vpack.c.b16 %v634, %v632
    %v719 = vpack.c.b16 %v635, %v633
    %v720 = vpack.c.b16 %v638, %v636
    %v721 = vpack.c.b16 %v639, %v637
    %v722 = vpack.c.b16 %v642, %v640
    %v723 = vpack.c.b16 %v643, %v641
    %v724 = vpack.c.b16 %v646, %v644
    %v725 = vpack.c.b16 %v647, %v645
    %v726 = vpack.c.b16 %v650, %v648
    %v727 = vpack.c.b16 %v651, %v649
    %v728 = vpack.c.b16 %v654, %v652
    %v729 = vpack.c.b16 %v655, %v653
    %v730 = vpack.c.b16 %v658, %v656
    %v731 = vpack.c.b16 %v659, %v657
    %v732 = vpack.c.b16 %v662, %v660
    %v733 = vpack.c.b16 %v663, %v661
    %v734 = vpack.c.b16 %v666, %v664
    %v735 = vpack.c.b16 %v667, %v665
    %v736 = vpack.c.b16 %v670, %v668
    %v737 = vpack.c.b16 %v671, %v669
    %v738 = vpack.c.b16 %v674, %v672
    %v739 = vpack.c.b16 %v675, %v673
    %804 = vmatprep.subr.bf16.mxu0 %v677
    %805 = vmatpush1.bf16.msra.mxu0 %v676
    %806 = vmatprep.subr.bf16.mxu0 %v679
    %807 = vmatpush1.bf16.msra.mxu0 %v678
    %808 = vmatprep.subr.bf16.mxu0 %v681
    %809 = vmatpush1.bf16.msra.mxu0 %v680
    %810 = vmatprep.subr.bf16.mxu0 %v683
    %811 = vmatpush1.bf16.msra.mxu0 %v682
    %812 = vmatprep.subr.bf16.mxu0 %v685
    %813 = vmatpush1.bf16.msra.mxu0 %v684
    %814 = vmatprep.subr.bf16.mxu0 %v687
    %815 = vmatpush1.bf16.msra.mxu0 %v686
    %816 = vmatprep.subr.bf16.mxu0 %v689
    %817 = vmatpush1.bf16.msra.mxu0 %v688
    %818 = vmatprep.subr.bf16.mxu0 %v691
    %819 = vmatpush1.bf16.msra.mxu0 %v690
    %820 = vmatprep.subr.bf16.mxu0 %v693
    %821 = vmatpush1.bf16.msra.mxu0 %v692
    %822 = vmatprep.subr.bf16.mxu0 %v695
    %823 = vmatpush1.bf16.msra.mxu0 %v694
    %824 = vmatprep.subr.bf16.mxu0 %v697
    %825 = vmatpush1.bf16.msra.mxu0 %v696
    %826 = vmatprep.subr.bf16.mxu0 %v699
    %827 = vmatpush1.bf16.msra.mxu0 %v698
    %828 = vmatprep.subr.bf16.mxu0 %v701
    %829 = vmatpush1.bf16.msra.mxu0 %v700
    %830 = vmatprep.subr.bf16.mxu0 %v703
    %831 = vmatpush1.bf16.msra.mxu0 %v702
    %832 = vmatprep.subr.bf16.mxu0 %v705
    %833 = vmatpush1.bf16.msra.mxu0 %v704
    %834 = vmatprep.subr.bf16.mxu0 %v707
    %835 = vmatpush1.bf16.msra.mxu0 %v706
    %836 = vmatprep.mubr.bf16.mxu0 %v405
    %837 = vmatmul.mubr.bf16.gmra.mrb[0].mxu0 %v404
    %v838 = vpop.f32.mrb[0].mxu0
    %v839 = vadd.f32 %v477, %v838
    %v840 = vpop.f32.mrb[0].mxu0
    %v841 = vadd.f32 %v481, %v840
    %v842 = vpop.f32.mrb[0].mxu0
    %v843 = vadd.f32 %v477, %v842
    %v844 = vpop.f32.mrb[0].mxu0
    %v845 = vadd.f32 %v481, %v844
    %846 = vdwg.mxu0
    %847 = vmatprep.subr.bf16.mxu0 %v709
    %848 = vmatpush1.bf16.msra.mxu0 %v708
    %849 = vmatprep.subr.bf16.mxu0 %v711
    %850 = vmatpush1.bf16.msra.mxu0 %v710
    %851 = vmatprep.subr.bf16.mxu0 %v713
    %852 = vmatpush1.bf16.msra.mxu0 %v712
    %853 = vmatprep.subr.bf16.mxu0 %v715
    %854 = vmatpush1.bf16.msra.mxu0 %v714
    %855 = vmatprep.subr.bf16.mxu0 %v717
    %856 = vmatpush1.bf16.msra.mxu0 %v716
    %857 = vmatprep.subr.bf16.mxu0 %v719
    %858 = vmatpush1.bf16.msra.mxu0 %v718
    %859 = vmatprep.subr.bf16.mxu0 %v721
    %860 = vmatpush1.bf16.msra.mxu0 %v720
    %861 = vmatprep.subr.bf16.mxu0 %v723
    %862 = vmatpush1.bf16.msra.mxu0 %v722
    %863 = vmatprep.subr.bf16.mxu0 %v725
    %864 = vmatpush1.bf16.msra.mxu0 %v724
    %865 = vmatprep.subr.bf16.mxu0 %v727
    %866 = vmatpush1.bf16.msra.mxu0 %v726
    %867 = vmatprep.subr.bf16.mxu0 %v729
    %868 = vmatpush1.bf16.msra.mxu0 %v728
    %869 = vmatprep.subr.bf16.mxu0 %v731
    %870 = vmatpush1.bf16.msra.mxu0 %v730
    %871 = vmatprep.subr.bf16.mxu0 %v733
    %872 = vmatpush1.bf16.msra.mxu0 %v732
    %873 = vmatprep.subr.bf16.mxu0 %v735
    %874 = vmatpush1.bf16.msra.mxu0 %v734
    %875 = vmatprep.subr.bf16.mxu0 %v737
    %876 = vmatpush1.bf16.msra.mxu0 %v736
    %877 = vmatprep.subr.bf16.mxu0 %v739
    %878 = vmatpush1.bf16.msra.mxu0 %v738
    %879 = vmatprep.mubr.bf16.mxu0 %v407
    %880 = vmatmul.mubr.bf16.gmra.mrb[0].mxu0 %v406
    %v881 = vpop.f32.mrb[0].mxu0
    %v882 = vadd.f32 %v839, %v881
    %v883 = vpop.f32.mrb[0].mxu0
    %v884 = vadd.f32 %v841, %v883
    %v885 = vpop.f32.mrb[0].mxu0
    %v886 = vadd.f32 %v843, %v885
    %v887 = vpop.f32.mrb[0].mxu0
    %v888 = vadd.f32 %v845, %v887
    %889 = vdwg.mxu0
    %v890 = vmax.f32 %v882, 0.0
    %v891 = vmax.f32 %v884, 0.0
    %v892 = vmax.f32 %v886, 0.0
    %v893 = vmax.f32 %v888, 0.0
    %v894 = vpack.c.bf16 %v892, %v890
    %v895 = vpack.c.bf16 %v893, %v891
    %v896 = vld [vmem:[#allocation6] sm:$0xf]
    %v897 = vld [vmem:[#allocation6 + $0x4] sm:$0xf]
    %v898 = vld [vmem:[#allocation6 + $0x8] sm:$0xf]
    %v899 = vld [vmem:[#allocation6 + $0xc] sm:$0xf]
    %v900 = vld [vmem:[#allocation6 + $0x10] sm:$0xf]
    %v901 = vld [vmem:[#allocation6 + $0x14] sm:$0xf]
    %v902 = vld [vmem:[#allocation6 + $0x18] sm:$0xf]
    %v903 = vld [vmem:[#allocation6 + $0x1c] sm:$0xf]
    %v904 = vld [vmem:[#allocation6 + $0x20] sm:$0xf]
    %v905 = vld [vmem:[#allocation6 + $0x24] sm:$0xf]
    %v906 = vld [vmem:[#allocation6 + $0x28] sm:$0xf]
    %v907 = vld [vmem:[#allocation6 + $0x2c] sm:$0xf]
    %v908 = vld [vmem:[#allocation6 + $0x30] sm:$0xf]
    %v909 = vld [vmem:[#allocation6 + $0x34] sm:$0xf]
    %v910 = vld [vmem:[#allocation6 + $0x38] sm:$0xf]
    %v911 = vld [vmem:[#allocation6 + $0x3c] sm:$0xf]
    %v912 = vld [vmem:[#allocation6 + $0x40] sm:$0xf]
    %v913 = vld [vmem:[#allocation6 + $0x44] sm:$0xf]
    %v914 = vld [vmem:[#allocation6 + $0x48] sm:$0xf]
    %v915 = vld [vmem:[#allocation6 + $0x4c] sm:$0xf]
    %v916 = vld [vmem:[#allocation6 + $0x50] sm:$0xf]
    %v917 = vld [vmem:[#allocation6 + $0x54] sm:$0xf]
    %v918 = vld [vmem:[#allocation6 + $0x58] sm:$0xf]
    %v919 = vld [vmem:[#allocation6 + $0x5c] sm:$0xf]
    %v920 = vld [vmem:[#allocation6 + $0x60] sm:$0xf]
    %v921 = vld [vmem:[#allocation6 + $0x64] sm:$0xf]
    %v922 = vld [vmem:[#allocation6 + $0x68] sm:$0xf]
    %v923 = vld [vmem:[#allocation6 + $0x6c] sm:$0xf]
    %v924 = vld [vmem:[#allocation6 + $0x70] sm:$0xf]
    %v925 = vld [vmem:[#allocation6 + $0x74] sm:$0xf]
    %v926 = vld [vmem:[#allocation6 + $0x78] sm:$0xf]
    %v927 = vld [vmem:[#allocation6 + $0x7c] sm:$0xf]
    %v928 = vld [vmem:[%s6] sm:$0x1]
    %v930 = vlaneseq
    %v931 = vshrl.u32 %v930, 7
    %v932 = vsub.s32 0, %v931
    %v933 = vrot.slane %v928, %v932
    %v967 = vunpack.c.l.b16 %v896
    %v968 = vunpack.c.l.b16 %v897
    %v969 = vunpack.c.l.b16 %v898
    %v970 = vunpack.c.l.b16 %v899
    %v971 = vunpack.c.l.b16 %v900
    %v972 = vunpack.c.l.b16 %v901
    %v973 = vunpack.c.l.b16 %v902
    %v974 = vunpack.c.l.b16 %v903
    %v975 = vunpack.c.l.b16 %v904
    %v976 = vunpack.c.l.b16 %v905
    %v977 = vunpack.c.l.b16 %v906
    %v978 = vunpack.c.l.b16 %v907
    %v979 = vunpack.c.l.b16 %v908
    %v980 = vunpack.c.l.b16 %v909
    %v981 = vunpack.c.l.b16 %v910
    %v982 = vunpack.c.l.b16 %v911
    %v983 = vunpack.c.l.b16 %v912
    %v984 = vunpack.c.l.b16 %v913
    %v985 = vunpack.c.l.b16 %v914
    %v986 = vunpack.c.l.b16 %v915
    %v987 = vunpack.c.l.b16 %v916
    %v988 = vunpack.c.l.b16 %v917
    %v989 = vunpack.c.l.b16 %v918
    %v990 = vunpack.c.l.b16 %v919
    %v991 = vunpack.c.l.b16 %v920
    %v992 = vunpack.c.l.b16 %v921
    %v993 = vunpack.c.l.b16 %v922
    %v994 = vunpack.c.l.b16 %v923
    %v995 = vunpack.c.l.b16 %v924
    %v996 = vunpack.c.l.b16 %v925
    %v997 = vunpack.c.l.b16 %v926
    %v998 = vunpack.c.l.b16 %v927
    %v999 = vpack.c.b16 %v968, %v967
    %v1000 = vpack.c.b16 %v970, %v969
    %v1001 = vpack.c.b16 %v972, %v971
    %v1002 = vpack.c.b16 %v974, %v973
    %v1003 = vpack.c.b16 %v976, %v975
    %v1004 = vpack.c.b16 %v978, %v977
    %v1005 = vpack.c.b16 %v980, %v979
    %v1006 = vpack.c.b16 %v982, %v981
    %v1007 = vpack.c.b16 %v984, %v983
    %v1008 = vpack.c.b16 %v986, %v985
    %v1009 = vpack.c.b16 %v988, %v987
    %v1010 = vpack.c.b16 %v990, %v989
    %v1011 = vpack.c.b16 %v992, %v991
    %v1012 = vpack.c.b16 %v994, %v993
    %v1013 = vpack.c.b16 %v996, %v995
    %v1014 = vpack.c.b16 %v998, %v997
    %1031 = vmatprep.subr.bf16.mxu0 0
    %1032 = vmatpush1.bf16.msra.mxu0 %v999
    %1033 = vmatprep.subr.bf16.mxu0 0
    %1034 = vmatpush1.bf16.msra.mxu0 %v1000
    %1035 = vmatprep.subr.bf16.mxu0 0
    %1036 = vmatpush1.bf16.msra.mxu0 %v1001
    %1037 = vmatprep.subr.bf16.mxu0 0
    %1038 = vmatpush1.bf16.msra.mxu0 %v1002
    %1039 = vmatprep.subr.bf16.mxu0 0
    %1040 = vmatpush1.bf16.msra.mxu0 %v1003
    %1041 = vmatprep.subr.bf16.mxu0 0
    %1042 = vmatpush1.bf16.msra.mxu0 %v1004
    %1043 = vmatprep.subr.bf16.mxu0 0
    %1044 = vmatpush1.bf16.msra.mxu0 %v1005
    %1045 = vmatprep.subr.bf16.mxu0 0
    %1046 = vmatpush1.bf16.msra.mxu0 %v1006
    %1047 = vmatprep.subr.bf16.mxu0 0
    %1048 = vmatpush1.bf16.msra.mxu0 %v1007
    %1049 = vmatprep.subr.bf16.mxu0 0
    %1050 = vmatpush1.bf16.msra.mxu0 %v1008
    %1051 = vmatprep.subr.bf16.mxu0 0
    %1052 = vmatpush1.bf16.msra.mxu0 %v1009
    %1053 = vmatprep.subr.bf16.mxu0 0
    %1054 = vmatpush1.bf16.msra.mxu0 %v1010
    %1055 = vmatprep.subr.bf16.mxu0 0
    %1056 = vmatpush1.bf16.msra.mxu0 %v1011
    %1057 = vmatprep.subr.bf16.mxu0 0
    %1058 = vmatpush1.bf16.msra.mxu0 %v1012
    %1059 = vmatprep.subr.bf16.mxu0 0
    %1060 = vmatpush1.bf16.msra.mxu0 %v1013
    %1061 = vmatprep.subr.bf16.mxu0 0
    %1062 = vmatpush1.bf16.msra.mxu0 %v1014
    %1063 = vmatprep.mubr.bf16.mxu0 %v895
    %1064 = vmatmul.mubr.bf16.gmra.mrb[0].mxu0 %v894
    %v1065 = vpop.f32.mrb[0].mxu0
    %v1066 = vadd.f32 %v933, %v1065
    %v1067 = vpop.f32.mrb[0].mxu0
    %v1068 = vpop.f32.mrb[0].mxu0
    %v1069 = vadd.f32 %v933, %v1068
    %v1070 = vpop.f32.mrb[0].mxu0
    %1071 = vdwg.mxu0
    %v1072 = vmax.f32 %v1066, 0.0
    %v1073 = vmax.f32 %v1069, 0.0
    %v1074 = vpack.c.bf16 %v1073, %v1072
    %v1075 = vld [vmem:[#allocation7] sm:$0xf]
    %v1076 = vld [vmem:[#allocation7 + $0x4] sm:$0xf]
    %v1077 = vld [vmem:[#allocation7 + $0x8] sm:$0xf]
    %v1078 = vld [vmem:[#allocation7 + $0xc] sm:$0xf]
    %v1079 = vld [vmem:[#allocation7 + $0x10] sm:$0xf]
    %v1080 = vld [vmem:[#allocation7 + $0x14] sm:$0xf]
    %v1081 = vld [vmem:[#allocation7 + $0x18] sm:$0xf]
    %v1082 = vld [vmem:[#allocation7 + $0x1c] sm:$0xf]
    %v1083 = vld [vmem:[#allocation7 + $0x20] sm:$0xf]
    %v1084 = vld [vmem:[#allocation7 + $0x24] sm:$0xf]
    %v1085 = vld [vmem:[#allocation7 + $0x28] sm:$0xf]
    %v1086 = vld [vmem:[#allocation7 + $0x2c] sm:$0xf]
    %v1087 = vld [vmem:[#allocation7 + $0x30] sm:$0xf]
    %v1088 = vld [vmem:[#allocation7 + $0x34] sm:$0xf]
    %v1089 = vld [vmem:[#allocation7 + $0x38] sm:$0xf]
    %v1090 = vld [vmem:[#allocation7 + $0x3c] sm:$0xf]
    %v1091 = vld [vmem:[%s8] sm:$0x1]
    %v1093 = vlaneseq
    %v1094 = vshrl.u32 %v1093, 7
    %v1095 = vsub.s32 0, %v1094
    %v1096 = vrot.slane %v1091, %v1095
    %v1114 = vunpack.c.l.b16 %v1075
    %v1115 = vunpack.c.l.b16 %v1076
    %v1116 = vunpack.c.l.b16 %v1077
    %v1117 = vunpack.c.l.b16 %v1078
    %v1118 = vunpack.c.l.b16 %v1079
    %v1119 = vunpack.c.l.b16 %v1080
    %v1120 = vunpack.c.l.b16 %v1081
    %v1121 = vunpack.c.l.b16 %v1082
    %v1122 = vunpack.c.l.b16 %v1083
    %v1123 = vunpack.c.l.b16 %v1084
    %v1124 = vunpack.c.l.b16 %v1085
    %v1125 = vunpack.c.l.b16 %v1086
    %v1126 = vunpack.c.l.b16 %v1087
    %v1127 = vunpack.c.l.b16 %v1088
    %v1128 = vunpack.c.l.b16 %v1089
    %v1129 = vunpack.c.l.b16 %v1090
    %v1130 = vpack.c.b16 %v1115, %v1114
    %v1131 = vpack.c.b16 %v1117, %v1116
    %v1132 = vpack.c.b16 %v1119, %v1118
    %v1133 = vpack.c.b16 %v1121, %v1120
    %v1134 = vpack.c.b16 %v1123, %v1122
    %v1135 = vpack.c.b16 %v1125, %v1124
    %v1136 = vpack.c.b16 %v1127, %v1126
    %v1137 = vpack.c.b16 %v1129, %v1128
    %1146 = vmatprep.subr.bf16.mxu0 0
    %1147 = vmatpush1.bf16.msra.mxu0 %v1130
    %1148 = vmatprep.subr.bf16.mxu0 0
    %1149 = vmatpush1.bf16.msra.mxu0 %v1131
    %1150 = vmatprep.subr.bf16.mxu0 0
    %1151 = vmatpush1.bf16.msra.mxu0 %v1132
    %1152 = vmatprep.subr.bf16.mxu0 0
    %1153 = vmatpush1.bf16.msra.mxu0 %v1133
    %1154 = vmatprep.subr.bf16.mxu0 0
    %1155 = vmatpush1.bf16.msra.mxu0 %v1134
    %1156 = vmatprep.subr.bf16.mxu0 0
    %1157 = vmatpush1.bf16.msra.mxu0 %v1135
    %1158 = vmatprep.subr.bf16.mxu0 0
    %1159 = vmatpush1.bf16.msra.mxu0 %v1136
    %1160 = vmatprep.subr.bf16.mxu0 0
    %1161 = vmatpush1.bf16.msra.mxu0 %v1137
    %1162 = vmatprep.subr.bf16.mxu0 0
    %1163 = vmatpush1.bf16.msra.mxu0 0
    %1164 = vmatprep.subr.bf16.mxu0 0
    %1165 = vmatpush1.bf16.msra.mxu0 0
    %1166 = vmatprep.subr.bf16.mxu0 0
    %1167 = vmatpush1.bf16.msra.mxu0 0
    %1168 = vmatprep.subr.bf16.mxu0 0
    %1169 = vmatpush1.bf16.msra.mxu0 0
    %1170 = vmatprep.subr.bf16.mxu0 0
    %1171 = vmatpush1.bf16.msra.mxu0 0
    %1172 = vmatprep.subr.bf16.mxu0 0
    %1173 = vmatpush1.bf16.msra.mxu0 0
    %1174 = vmatprep.subr.bf16.mxu0 0
    %1175 = vmatpush1.bf16.msra.mxu0 0
    %1176 = vmatprep.subr.bf16.mxu0 0
    %1177 = vmatpush1.bf16.msra.mxu0 0
    %1178 = vmatprep.mubr.bf16.mxu0 0
    %1179 = vmatmul.mubr.bf16.gmra.mrb[0].mxu0 %v1074
    %v1180 = vpop.f32.mrb[0].mxu0
    %v1181 = vadd.f32 %v1096, %v1180
    %v1182 = vpop.f32.mrb[0].mxu0
    %v1183 = vpop.f32.mrb[0].mxu0
    %v1184 = vadd.f32 %v1096, %v1183
    %v1185 = vpop.f32.mrb[0].mxu0
    %1186 = vdwg.mxu0
    %1187 = vst [vmem:[%s9] sm:$0xff] %v1181
    %1188 = vst [vmem:[%s9 + $0x8] sm:$0xff] %v1184
    // Predicated region
    $region54: #{dqn_forward.1} parent=1 // pred_check
      _
    $region55: #{dqn_forward.1} parent=1 // pred_check_branch
      %1190 = sbr.rel (0) target = $region57
    $region56: #{dqn_forward.1} parent=1 // pred_region
      _
    $region57: #{dqn_forward.1} parent=1 // pred_fallthru
      _
    // Predicated region
    $region58: #{dqn_forward.1} parent=1 // pred_check
      _
    $region59: #{dqn_forward.1} parent=1 // pred_check_branch
      %1192 = sbr.rel (0) target = $region61
    $region60: #{dqn_forward.1} parent=1 // pred_region
      _
    $region61: #{dqn_forward.1} parent=1 // pred_fallthru
      _
    %1193 = vsyncpa [#allocation3], 1
    %1194 = vsyncpa [#allocation5], 1
    %1195 = vsyncpa [#allocation8], 1

</llo_original>
